<compile_context>
chip_gen: v6e
topology: v6e:2x2x1
jax: 0.10.0
libtpu: 0.0.40
codegen_flags: <defaults>
</compile_context>

<pallas_src>
import functools

import jax
import jax.numpy as jnp
from jax.experimental import pallas as pl
from jax.experimental.pallas import tpu as pltpu


def _round_up(x, m):
    return ((x + m - 1) // m) * m


def _apply_activation(y, activation):
    if activation == "tanh":
        return jnp.tanh(y)
    if activation == "relu":
        return jnp.maximum(y, 0.0)
    if activation == "sigmoid":
        return jax.nn.sigmoid(y)
    if activation == "LeakyReLU":
        return jnp.where(y >= 0.0, y, 0.01 * y)
    if activation is None:
        return y
    raise ValueError(f"Activation {activation} not recognized")


def _ffnn_kernel(x_ref, w_in_ref, b_in_ref, w_hid_ref, b_hid_ref,
                 w_out_ref, b_out_ref, o_ref, *, n_hidden, activation):
    """One batch tile through the whole MLP, activations resident in VMEM/vregs."""
    cdt = w_in_ref.dtype  # compute dtype of the MXU operands (f32 or bf16)

    # Input layer: [TB, Din_p] @ [Din_p, H_p] -> f32 accumulate on the MXU.
    h = jnp.dot(x_ref[...], w_in_ref[...], preferred_element_type=jnp.float32)
    h = _apply_activation(h + b_in_ref[...], activation).astype(cdt)

    # Hidden layers: loop in-kernel, no HBM round trips, no extra kernel launches.
    if n_hidden > 0:
        def body(l, h):
            y = jnp.dot(h, w_hid_ref[l], preferred_element_type=jnp.float32)
            return _apply_activation(y + b_hid_ref[l], activation).astype(cdt)
        h = jax.lax.fori_loop(0, n_hidden, body, h)

    # Output layer (no activation); lane-dense padded store.
    y = jnp.dot(h, w_out_ref[...], preferred_element_type=jnp.float32)
    o_ref[...] = (y + b_out_ref[...]).astype(o_ref.dtype)


def fused_ffnn(x_pad, w_in, b_in, w_hid, b_hid, w_out, b_out,
               *, n_hidden, activation, tb, out_dtype=jnp.float32):
    """x_pad: [B_pad, Din_p] (B_pad % tb == 0). All feature dims already padded."""
    B_pad, Din_p = x_pad.shape
    H_p = w_in.shape[1]
    Dout_p = w_out.shape[1]
    Lh = w_hid.shape[0]  # >= 1 (dummy layer if n_hidden == 0; loop runs 0 times)

    kernel = functools.partial(_ffnn_kernel, n_hidden=n_hidden, activation=activation)

    # Honest cost hint for the XLA scheduler around the fused custom call.
    flops = 2 * B_pad * (Din_p * H_p + n_hidden * H_p * H_p + H_p * Dout_p)
    transc = B_pad * H_p * (1 + n_hidden) if activation in ("tanh", "sigmoid") else 0
    arrays = (x_pad, w_in, b_in, w_hid, b_hid, w_out, b_out)
    bytes_accessed = sum(int(a.size) * a.dtype.itemsize for a in arrays)
    bytes_accessed += B_pad * Dout_p * jnp.dtype(out_dtype).itemsize

    # VMEM budget: weights (resident) + double-buffered batch tiles. Only raise the
    # scoped limit if we actually need more than the smallest default (v5e ~16 MiB);
    # cap at 64 MiB so the same code is safe on v7x's smaller physical VMEM.
    weight_bytes = sum(int(a.size) * a.dtype.itemsize
                       for a in (w_in, b_in, w_hid, b_hid, w_out, b_out))
    tile_bytes = 2 * (tb * Din_p + tb * Dout_p) * x_pad.dtype.itemsize
    work_bytes = 2 * tb * H_p * 4  # in-flight activations (f32)
    need = weight_bytes + tile_bytes + work_bytes
    vmem_limit = min(max(2 * need, 32 << 20), 64 << 20) if need > (14 << 20) else None
    # TODO(synk): for very wide nets (neurons >~ 2k) stream one hidden layer's weights
    # at a time (pl.Buffered on the weight spec) instead of keeping the full stack resident.

    cp_kwargs = dict(dimension_semantics=("parallel",))
    if vmem_limit is not None:
        cp_kwargs["vmem_limit_bytes"] = int(vmem_limit)

    return pl.pallas_call(
        kernel,
        out_shape=jax.ShapeDtypeStruct((B_pad, Dout_p), out_dtype),
        grid=(B_pad // tb,),
        in_specs=[
            pl.BlockSpec((tb, Din_p), lambda i: (i, 0)),        # x: tiled over batch
            pl.BlockSpec((Din_p, H_p), lambda i: (0, 0)),       # weights: full blocks,
            pl.BlockSpec((1, H_p), lambda i: (0, 0)),           # VMEM-resident across grid
            pl.BlockSpec((Lh, H_p, H_p), lambda i: (0, 0, 0)),
            pl.BlockSpec((Lh, 1, H_p), lambda i: (0, 0, 0)),
            pl.BlockSpec((H_p, Dout_p), lambda i: (0, 0)),
            pl.BlockSpec((1, Dout_p), lambda i: (0, 0)),
        ],
        out_specs=pl.BlockSpec((tb, Dout_p), lambda i: (i, 0)),
        compiler_params=pltpu.CompilerParams(**cp_kwargs),
        cost_estimate=pl.CostEstimate(flops=int(flops),
                                      transcendentals=int(transc),
                                      bytes_accessed=int(bytes_accessed)),
    )(x_pad, w_in, b_in, w_hid, b_hid, w_out, b_out)


class FFNNPallas:
    """Mirror of the PyTorch FFNN module; forward runs as one fused Pallas kernel."""

    def __init__(self, input_dimension, output_dimension, n_hidden_layers,
                 neurons, activation="tanh", key=None, weight_dtype=jnp.float32):
        self.input_dimension = input_dimension
        self.output_dimension = output_dimension
        self.neurons = neurons
        self.n_hidden_layers = n_hidden_layers
        self.activation = activation
        self.weight_dtype = weight_dtype
        if key is None:
            key = jax.random.PRNGKey(0)

        def init_linear(k, fan_in, fan_out):
            # Mimics torch.nn.Linear default init: U(-1/sqrt(fan_in), 1/sqrt(fan_in)).
            kw, kb = jax.random.split(k)
            bound = 1.0 / jnp.sqrt(fan_in)
            w = jax.random.uniform(kw, (fan_in, fan_out), jnp.float32, -bound, bound)
            b = jax.random.uniform(kb, (fan_out,), jnp.float32, -bound, bound)
            return w, b

        keys = jax.random.split(key, n_hidden_layers + 1)
        # Unpadded params (weights stored as [in, out] so y = x @ W + b).
        self.input_layer = init_linear(keys[0], input_dimension, neurons)
        self.hidden_layers = [init_linear(keys[1 + i], neurons, neurons)
                              for i in range(n_hidden_layers - 1)]
        self.output_layer = init_linear(keys[n_hidden_layers], neurons, output_dimension)

        self._build_padded()

    def _build_padded(self):
        Din, H, Dout = self.input_dimension, self.neurons, self.output_dimension
        self.Din_p = _round_up(Din, 128)
        self.H_p = _round_up(H, 128)
        self.Dout_p = _round_up(Dout, 128)
        wdt = self.weight_dtype

        def pad2(a, r, c):
            return jnp.pad(a, ((0, r - a.shape[0]), (0, c - a.shape[1])))

        w_in, b_in = self.input_layer
        self.w_in_p = pad2(w_in, self.Din_p, self.H_p).astype(wdt)
        self.b_in_p = pad2(b_in.reshape(1, H), 1, self.H_p).astype(jnp.float32)

        n_hidden = len(self.hidden_layers)
        if n_hidden > 0:
            self.w_hid_p = jnp.stack(
                [pad2(w, self.H_p, self.H_p) for (w, _) in self.hidden_layers]
            ).astype(wdt)
            self.b_hid_p = jnp.stack(
                [pad2(b.reshape(1, H), 1, self.H_p) for (_, b) in self.hidden_layers]
            ).astype(jnp.float32)
        else:  # dummy (unused; the in-kernel loop runs 0 times)
            self.w_hid_p = jnp.zeros((1, self.H_p, self.H_p), wdt)
            self.b_hid_p = jnp.zeros((1, 1, self.H_p), jnp.float32)

        w_out, b_out = self.output_layer
        self.w_out_p = pad2(w_out, self.H_p, self.Dout_p).astype(wdt)
        self.b_out_p = pad2(b_out.reshape(1, Dout), 1, self.Dout_p).astype(jnp.float32)

    def __call__(self, x):
        orig_shape = x.shape
        x2 = x.reshape(-1, orig_shape[-1])
        B = x2.shape[0]

        tb = min(_round_up(B, 8), 256)        # batch tile: multiple of 8 sublanes
        B_pad = _round_up(B, tb)

        x_pad = jnp.zeros((B_pad, self.Din_p), self.weight_dtype)
        x_pad = x_pad.at[:B, :self.input_dimension].set(x2.astype(self.weight_dtype))

        out_pad = fused_ffnn(
            x_pad, self.w_in_p, self.b_in_p, self.w_hid_p, self.b_hid_p,
            self.w_out_p, self.b_out_p,
            n_hidden=len(self.hidden_layers), activation=self.activation,
            tb=tb, out_dtype=jnp.float32)

        out = out_pad[:B, :self.output_dimension]
        return out.reshape(orig_shape[:-1] + (self.output_dimension,))

    # Pure-JAX reference (same unpadded params) for correctness checking.
    def reference(self, x):
        w, b = self.input_layer
        h = _apply_activation(x @ w + b, self.activation)
        for (w, b) in self.hidden_layers:
            h = _apply_activation(h @ w + b, self.activation)
        w, b = self.output_layer
        return h @ w + b


if __name__ == "__main__":
    key = jax.random.PRNGKey(0)
    k_in, k_params = jax.random.split(key)

    batch = 8
    input_dimension = 16
    output_dimension = 4
    neurons = 32
    n_hidden_layers = 3

    x = jax.random.normal(k_in, (batch, input_dimension), jnp.float32)

    model = FFNNPallas(input_dimension, output_dimension, n_hidden_layers,
                       neurons=neurons, activation="tanh", key=k_params)

    out = jax.block_until_ready(model(x))
    ref = jax.block_until_ready(model.reference(x))

    assert out.shape == (batch, output_dimension)
    assert jnp.allclose(out, ref, atol=1e-5, rtol=1e-5), "mismatch vs pure-JAX reference"
    print("KERNEL_OK")
</pallas_src>

<mosaic_0001>
module attributes {stable_mosaic.version = 11 : i64} {
  func.func @_ffnn_kernel(%arg0: i32, %arg1: memref<8x128xf32, #tpu.memory_space<vmem>>, %arg2: memref<128x128xf32, #tpu.memory_space<vmem>>, %arg3: memref<1x128xf32, #tpu.memory_space<vmem>>, %arg4: memref<2x128x128xf32, #tpu.memory_space<vmem>>, %arg5: memref<2x1x128xf32, #tpu.memory_space<vmem>>, %arg6: memref<128x128xf32, #tpu.memory_space<vmem>>, %arg7: memref<1x128xf32, #tpu.memory_space<vmem>>, %arg8: memref<8x128xf32, #tpu.memory_space<vmem>>) attributes {dimension_semantics = [#tpu.dimension_semantics<parallel>], iteration_bounds = array<i64: 1>, scalar_prefetch = 0 : i64, scratch_operands = 0 : i64, tpu.core_type = #tpu.core_type<tc>, window_params = [{transform_indices = @transform_0, window_bounds = array<i64: 8, 128>}, {pipeline_mode = #tpu.pipeline_mode<synchronous>, transform_indices = @transform_1, window_bounds = array<i64: 128, 128>}, {pipeline_mode = #tpu.pipeline_mode<synchronous>, transform_indices = @transform_2, window_bounds = array<i64: 1, 128>}, {pipeline_mode = #tpu.pipeline_mode<synchronous>, transform_indices = @transform_3, window_bounds = array<i64: 2, 128, 128>}, {pipeline_mode = #tpu.pipeline_mode<synchronous>, transform_indices = @transform_4, window_bounds = array<i64: 2, 1, 128>}, {pipeline_mode = #tpu.pipeline_mode<synchronous>, transform_indices = @transform_5, window_bounds = array<i64: 128, 128>}, {pipeline_mode = #tpu.pipeline_mode<synchronous>, transform_indices = @transform_6, window_bounds = array<i64: 1, 128>}, {transform_indices = @transform_7, window_bounds = array<i64: 8, 128>}]} {
    %c0 = arith.constant 0 : index
    %c0_0 = arith.constant 0 : index
    %0 = vector.load %arg1[%c0, %c0_0] : memref<8x128xf32, #tpu.memory_space<vmem>>, vector<8x128xf32>
    %c0_1 = arith.constant 0 : index
    %c0_2 = arith.constant 0 : index
    %1 = vector.load %arg2[%c0_1, %c0_2] : memref<128x128xf32, #tpu.memory_space<vmem>>, vector<128x128xf32>
    %cst = arith.constant dense<0.000000e+00> : vector<8x128xf32>
    %2 = tpu.matmul %0, %1, %cst {dimension_numbers = #tpu.dot_dimension_numbers<[1], [0], [0], [1], [0, 0, 1, 1], [], []>} : vector<8x128xf32>, vector<128x128xf32>, vector<8x128xf32> -> vector<8x128xf32>
    %c0_3 = arith.constant 0 : index
    %c0_4 = arith.constant 0 : index
    %3 = vector.load %arg3[%c0_3, %c0_4] : memref<1x128xf32, #tpu.memory_space<vmem>>, vector<1x128xf32>
    %4 = vector.broadcast %3 : vector<1x128xf32> to vector<8x128xf32>
    %5 = arith.addf %2, %4 : vector<8x128xf32>
    %6 = math.tanh %5 : vector<8x128xf32>
    %c0_i32 = arith.constant 0 : i32
    %c2_i32 = arith.constant 2 : i32
    %7 = arith.addi %c0_i32, %c2_i32 : i32
    %c1_i32 = arith.constant 1 : i32
    %8 = scf.for %arg9 = %c0_i32 to %7 step %c1_i32 iter_args(%arg10 = %6) -> (vector<8x128xf32>)  : i32 {
      %15 = arith.index_cast %arg9 : i32 to index
      %c0_13 = arith.constant 0 : index
      %c0_14 = arith.constant 0 : index
      %16 = vector.load %arg4[%15, %c0_13, %c0_14] : memref<2x128x128xf32, #tpu.memory_space<vmem>>, vector<1x128x128xf32>
      %17 = vector.shape_cast %16 : vector<1x128x128xf32> to vector<128x128xf32>
      %cst_15 = arith.constant dense<0.000000e+00> : vector<8x128xf32>
      %18 = tpu.matmul %arg10, %17, %cst_15 {dimension_numbers = #tpu.dot_dimension_numbers<[1], [0], [0], [1], [0, 0, 1, 1], [], []>} : vector<8x128xf32>, vector<128x128xf32>, vector<8x128xf32> -> vector<8x128xf32>
      %19 = arith.index_cast %arg9 : i32 to index
      %c0_16 = arith.constant 0 : index
      %c0_17 = arith.constant 0 : index
      %20 = vector.load %arg5[%19, %c0_16, %c0_17] : memref<2x1x128xf32, #tpu.memory_space<vmem>>, vector<1x1x128xf32>
      %21 = vector.shape_cast %20 : vector<1x1x128xf32> to vector<1x128xf32>
      %22 = vector.broadcast %21 : vector<1x128xf32> to vector<8x128xf32>
      %23 = arith.addf %18, %22 : vector<8x128xf32>
      %24 = math.tanh %23 : vector<8x128xf32>
      scf.yield %24 : vector<8x128xf32>
    }
    %c2_i32_5 = arith.constant 2 : i32
    %c0_6 = arith.constant 0 : index
    %c0_7 = arith.constant 0 : index
    %9 = vector.load %arg6[%c0_6, %c0_7] : memref<128x128xf32, #tpu.memory_space<vmem>>, vector<128x128xf32>
    %cst_8 = arith.constant dense<0.000000e+00> : vector<8x128xf32>
    %10 = tpu.matmul %8, %9, %cst_8 {dimension_numbers = #tpu.dot_dimension_numbers<[1], [0], [0], [1], [0, 0, 1, 1], [], []>} : vector<8x128xf32>, vector<128x128xf32>, vector<8x128xf32> -> vector<8x128xf32>
    %c0_9 = arith.constant 0 : index
    %c0_10 = arith.constant 0 : index
    %11 = vector.load %arg7[%c0_9, %c0_10] : memref<1x128xf32, #tpu.memory_space<vmem>>, vector<1x128xf32>
    %12 = vector.broadcast %11 : vector<1x128xf32> to vector<8x128xf32>
    %13 = arith.addf %10, %12 : vector<8x128xf32>
    %c0_11 = arith.constant 0 : index
    %c0_12 = arith.constant 0 : index
    %14 = vector.load %arg8[%c0_11, %c0_12] : memref<8x128xf32, #tpu.memory_space<vmem>>, vector<8x128xf32>
    tpu.vector_store %arg8[%c0_11, %c0_12], %13 {strides = array<i32>} : memref<8x128xf32, #tpu.memory_space<vmem>>, vector<8x128xf32>,
    return
  }
  func.func @transform_0(%arg0: i32) -> (i32, i32) {
    %c0_i32 = arith.constant 0 : i32
    %c0_i32_0 = arith.constant 0 : i32
    return %arg0, %c0_i32 : i32, i32
  }
  func.func @transform_1(%arg0: i32) -> (i32, i32) {
    %c0_i32 = arith.constant 0 : i32
    %c0_i32_0 = arith.constant 0 : i32
    %c0_i32_1 = arith.constant 0 : i32
    return %c0_i32, %c0_i32_0 : i32, i32
  }
  func.func @transform_2(%arg0: i32) -> (i32, i32) {
    %c0_i32 = arith.constant 0 : i32
    %c0_i32_0 = arith.constant 0 : i32
    %c0_i32_1 = arith.constant 0 : i32
    return %c0_i32, %c0_i32_0 : i32, i32
  }
  func.func @transform_3(%arg0: i32) -> (i32, i32, i32) {
    %c0_i32 = arith.constant 0 : i32
    %c0_i32_0 = arith.constant 0 : i32
    %c0_i32_1 = arith.constant 0 : i32
    %c0_i32_2 = arith.constant 0 : i32
    return %c0_i32, %c0_i32_0, %c0_i32_1 : i32, i32, i32
  }
  func.func @transform_4(%arg0: i32) -> (i32, i32, i32) {
    %c0_i32 = arith.constant 0 : i32
    %c0_i32_0 = arith.constant 0 : i32
    %c0_i32_1 = arith.constant 0 : i32
    %c0_i32_2 = arith.constant 0 : i32
    return %c0_i32, %c0_i32_0, %c0_i32_1 : i32, i32, i32
  }
  func.func @transform_5(%arg0: i32) -> (i32, i32) {
    %c0_i32 = arith.constant 0 : i32
    %c0_i32_0 = arith.constant 0 : i32
    %c0_i32_1 = arith.constant 0 : i32
    return %c0_i32, %c0_i32_0 : i32, i32
  }
  func.func @transform_6(%arg0: i32) -> (i32, i32) {
    %c0_i32 = arith.constant 0 : i32
    %c0_i32_0 = arith.constant 0 : i32
    %c0_i32_1 = arith.constant 0 : i32
    return %c0_i32, %c0_i32_0 : i32, i32
  }
  func.func @transform_7(%arg0: i32) -> (i32, i32) {
    %c0_i32 = arith.constant 0 : i32
    %c0_i32_0 = arith.constant 0 : i32
    return %arg0, %c0_i32 : i32, i32
  }
}

</mosaic_0001>

<llo_original>
// kernel: tpu_custom_call.1
$region0: #{tpu_custom_call.1}
  #allocation0 [shape = 'u32[]', space=smem, size = 0x4, offset = 0x4, fixed_abs, tag = 'smem constant byte address 0x4 - core index']
  #allocation1 [shape = 'u32[144,128]{1,0:T(1,128)}', space=vmem, size = 0x12000, scoped, tag = 'internal scratch']
  %s0 = inlined_call_operand.hbm [shape: f32[8,128], index: 0, kind: input, shape index: {}]
  %s1 = inlined_call_operand.hbm [shape: f32[128,128], index: 1, kind: input, shape index: {}]
  %s2 = inlined_call_operand.vmem [shape: f32[1,128], index: 2, kind: input, shape index: {}]
  %s3 = inlined_call_operand.hbm [shape: f32[2,128,128], index: 3, kind: input, shape index: {}]
  %s4 = inlined_call_operand.vmem [shape: f32[2,1,128], index: 4, kind: input, shape index: {}]
  %s5 = inlined_call_operand.hbm [shape: f32[128,128], index: 5, kind: input, shape index: {}]
  %s6 = inlined_call_operand.vmem [shape: f32[1,128], index: 6, kind: input, shape index: {}]
  %s7 = inlined_call_operand.hbm [shape: f32[8,128], index: 7, kind: output, shape index: {}]
  %s8 = sld [smem:[#allocation0]]
  $region61: #{tpu_custom_call.1} parent=0
    _
  %s10 = ssub.s32 1, %s8
  %s11 = scalar_select 0, %s10, %s8
  $region1: #{tpu_custom_call.1} parent=0
    #allocation2 [shape = 'u8[4096]{0}', space=vmem, size = 0x1000, scoped, tag = 'input window, operand 0, single buffered']
    #allocation3 [shape = 's32[1]{0}', space=sflag, size = 0x4, scoped, tag = 'scoped memory for tpu_custom_call.1']
    #allocation4 [shape = 's32[1]{0}', space=sflag, size = 0x4, scoped, tag = 'scoped memory for tpu_custom_call.1']
    #allocation5 [shape = 'u8[65536]{0}', space=vmem, size = 0x10000, scoped, tag = 'input window, operand 1, single buffered']
    #allocation6 [shape = 's32[1]{0}', space=sflag, size = 0x4, scoped, tag = 'scoped memory for tpu_custom_call.1']
    #allocation7 [shape = 'u8[131072]{0}', space=vmem, size = 0x20000, scoped, tag = 'input window, operand 3, single buffered']
    #allocation8 [shape = 'u8[65536]{0}', space=vmem, size = 0x10000, scoped, tag = 'input window, operand 5, single buffered']
    #allocation9 [shape = 's32[1]{0}', space=sflag, size = 0x4, scoped, tag = 'scoped memory for tpu_custom_call.1']
    #allocation10 [shape = 'u8[4096]{0}', space=vmem, size = 0x1000, scoped, tag = 'output window, operand 0, single buffered']
    %12 = vsyncpa [#allocation3], 0
    %13 = vsyncpa [#allocation6], 0
    %14 = vsyncpa [#allocation9], 0
    %15 = vsyncpa [#allocation4], 0
    // Predicated region
    $region2: #{tpu_custom_call.1} parent=1 // pred_check
      _
    $region3: #{tpu_custom_call.1} parent=1 // pred_check_branch
      %17 = sbr.rel (0) target = $region5
    $region4: #{tpu_custom_call.1} parent=1 // pred_region
      %s19 = ssub.s32 128, 128
      %20 = vsyncadd [#allocation3], %s19
      %s22 = sshll.u32 [#allocation2], 4
      %s23 = int_to_ptr.vmem [resolvable:$true] %s22
      %25 = dma.hbm_to_vmem [thread:$0]  %s0, 128, %s23, [#allocation3]
    $region5: #{tpu_custom_call.1} parent=1 // pred_fallthru
      _
    // Predicated region
    $region6: #{tpu_custom_call.1} parent=1 // pred_check
      _
    $region7: #{tpu_custom_call.1} parent=1 // pred_check_branch
      %27 = sbr.rel (0) target = $region9
    $region8: #{tpu_custom_call.1} parent=1 // pred_region
      %s29 = ssub.s32 2048, 2048
      %30 = vsyncadd [#allocation6], %s29
      %s31 = sshll.u32 [#allocation5], 4
      %s32 = int_to_ptr.vmem [resolvable:$true] %s31
      %37 = dma.hbm_to_vmem [thread:$0]  %s1, 2048, %s32, [#allocation6], 128, 128, 8
    $region9: #{tpu_custom_call.1} parent=1 // pred_fallthru
      _
    // Predicated region
    $region10: #{tpu_custom_call.1} parent=1 // pred_check
      _
    $region11: #{tpu_custom_call.1} parent=1 // pred_check_branch
      %39 = sbr.rel (0) target = $region13
    $region12: #{tpu_custom_call.1} parent=1 // pred_region
      _
    $region13: #{tpu_custom_call.1} parent=1 // pred_fallthru
      _
    // Predicated region
    $region14: #{tpu_custom_call.1} parent=1 // pred_check
      _
    $region15: #{tpu_custom_call.1} parent=1 // pred_check_branch
      %41 = sbr.rel (0) target = $region17
    $region16: #{tpu_custom_call.1} parent=1 // pred_region
      %s43 = ssub.s32 4096, 4096
      %44 = vsyncadd [#allocation6], %s43
      %s45 = sshll.u32 [#allocation7], 4
      %s46 = int_to_ptr.vmem [resolvable:$true] %s45
      %51 = dma.hbm_to_vmem [thread:$0]  %s3, 4096, %s46, [#allocation6], 128, 128, 8
    $region17: #{tpu_custom_call.1} parent=1 // pred_fallthru
      _
    // Predicated region
    $region18: #{tpu_custom_call.1} parent=1 // pred_check
      _
    $region19: #{tpu_custom_call.1} parent=1 // pred_check_branch
      %53 = sbr.rel (0) target = $region21
    $region20: #{tpu_custom_call.1} parent=1 // pred_region
      _
    $region21: #{tpu_custom_call.1} parent=1 // pred_fallthru
      _
    // Predicated region
    $region22: #{tpu_custom_call.1} parent=1 // pred_check
      _
    $region23: #{tpu_custom_call.1} parent=1 // pred_check_branch
      %55 = sbr.rel (0) target = $region25
    $region24: #{tpu_custom_call.1} parent=1 // pred_region
      %s57 = ssub.s32 2048, 2048
      %58 = vsyncadd [#allocation9], %s57
      %s59 = sshll.u32 [#allocation8], 4
      %s60 = int_to_ptr.vmem [resolvable:$true] %s59
      %65 = dma.hbm_to_vmem [thread:$0]  %s5, 2048, %s60, [#allocation9], 128, 128, 8
    $region25: #{tpu_custom_call.1} parent=1 // pred_fallthru
      _
    // Predicated region
    $region26: #{tpu_custom_call.1} parent=1 // pred_check
      _
    $region27: #{tpu_custom_call.1} parent=1 // pred_check_branch
      %67 = sbr.rel (0) target = $region29
    $region28: #{tpu_custom_call.1} parent=1 // pred_region
      _
    $region29: #{tpu_custom_call.1} parent=1 // pred_fallthru
      _
    // Predicated region
    $region30: #{tpu_custom_call.1} parent=1 // pred_check
      _
    $region31: #{tpu_custom_call.1} parent=1 // pred_check_branch
      %69 = sbr.rel (0) target = $region33
    $region32: #{tpu_custom_call.1} parent=1 // pred_region
      %70 = dma.done [#allocation3], 128
    $region33: #{tpu_custom_call.1} parent=1 // pred_fallthru
      _
    // Predicated region
    $region34: #{tpu_custom_call.1} parent=1 // pred_check
      _
    $region35: #{tpu_custom_call.1} parent=1 // pred_check_branch
      %72 = sbr.rel (0) target = $region37
    $region36: #{tpu_custom_call.1} parent=1 // pred_region
      %73 = dma.done [#allocation6], 2048
    $region37: #{tpu_custom_call.1} parent=1 // pred_fallthru
      _
    // Predicated region
    $region38: #{tpu_custom_call.1} parent=1 // pred_check
      _
    $region39: #{tpu_custom_call.1} parent=1 // pred_check_branch
      %75 = sbr.rel (0) target = $region41
    $region40: #{tpu_custom_call.1} parent=1 // pred_region
      %76 = dma.done [#allocation6], 4096
    $region41: #{tpu_custom_call.1} parent=1 // pred_fallthru
      _
    // Predicated region
    $region42: #{tpu_custom_call.1} parent=1 // pred_check
      _
    $region43: #{tpu_custom_call.1} parent=1 // pred_check_branch
      %78 = sbr.rel (0) target = $region45
    $region44: #{tpu_custom_call.1} parent=1 // pred_region
      %79 = dma.done [#allocation9], 2048
    $region45: #{tpu_custom_call.1} parent=1 // pred_fallthru
      _
    %v80 = vld [vmem:[#allocation2] sm:$0xff]
    %v81 = vld [vmem:[#allocation5] sm:$0xff]
    %v82 = vld [vmem:[#allocation5 + $0x8] sm:$0xff]
    %v83 = vld [vmem:[#allocation5 + $0x10] sm:$0xff]
    %v84 = vld [vmem:[#allocation5 + $0x18] sm:$0xff]
    %v85 = vld [vmem:[#allocation5 + $0x20] sm:$0xff]
    %v86 = vld [vmem:[#allocation5 + $0x28] sm:$0xff]
    %v87 = vld [vmem:[#allocation5 + $0x30] sm:$0xff]
    %v88 = vld [vmem:[#allocation5 + $0x38] sm:$0xff]
    %v89 = vld [vmem:[#allocation5 + $0x40] sm:$0xff]
    %v90 = vld [vmem:[#allocation5 + $0x48] sm:$0xff]
    %v91 = vld [vmem:[#allocation5 + $0x50] sm:$0xff]
    %v92 = vld [vmem:[#allocation5 + $0x58] sm:$0xff]
    %v93 = vld [vmem:[#allocation5 + $0x60] sm:$0xff]
    %v94 = vld [vmem:[#allocation5 + $0x68] sm:$0xff]
    %v95 = vld [vmem:[#allocation5 + $0x70] sm:$0xff]
    %v96 = vld [vmem:[#allocation5 + $0x78] sm:$0xff]
    %v97 = vld [vmem:[%s2] sm:$0x1]
    %v99 = vlaneseq
    %v100 = vshrl.u32 %v99, 7
    %v101 = vsub.s32 0, %v100
    %v102 = vrot.slane %v97, %v101
    %104 = vmatprep.subr.mxu0 0.0
    %105 = vmatpush1.msra.mxu0 %v96
    %106 = vmatprep.subr.mxu0 0.0
    %107 = vmatpush1.msra.mxu0 %v95
    %108 = vmatprep.subr.mxu0 0.0
    %109 = vmatpush1.msra.mxu0 %v94
    %110 = vmatprep.subr.mxu0 0.0
    %111 = vmatpush1.msra.mxu0 %v93
    %112 = vmatprep.subr.mxu0 0.0
    %113 = vmatpush1.msra.mxu0 %v92
    %114 = vmatprep.subr.mxu0 0.0
    %115 = vmatpush1.msra.mxu0 %v91
    %116 = vmatprep.subr.mxu0 0.0
    %117 = vmatpush1.msra.mxu0 %v90
    %118 = vmatprep.subr.mxu0 0.0
    %119 = vmatpush1.msra.mxu0 %v89
    %120 = vmatprep.subr.mxu0 0.0
    %121 = vmatpush1.msra.mxu0 %v88
    %122 = vmatprep.subr.mxu0 0.0
    %123 = vmatpush1.msra.mxu0 %v87
    %124 = vmatprep.subr.mxu0 0.0
    %125 = vmatpush1.msra.mxu0 %v86
    %126 = vmatprep.subr.mxu0 0.0
    %127 = vmatpush1.msra.mxu0 %v85
    %128 = vmatprep.subr.mxu0 0.0
    %129 = vmatpush1.msra.mxu0 %v84
    %130 = vmatprep.subr.mxu0 0.0
    %131 = vmatpush1.msra.mxu0 %v83
    %132 = vmatprep.subr.mxu0 0.0
    %133 = vmatpush1.msra.mxu0 %v82
    %134 = vmatprep.subr.mxu0 0.0
    %135 = vmatpush1.msra.mxu0 %v81
    %136 = vmatprep.subr.mxu0 0.0
    %137 = vmatpush2.msra.mxu0 0.0
    %138 = vmatprep.subr.mxu0 0.0
    %139 = vmatpush2.msra.mxu0 0.0
    %140 = vmatprep.subr.mxu0 0.0
    %141 = vmatpush2.msra.mxu0 0.0
    %142 = vmatprep.subr.mxu0 0.0
    %143 = vmatpush2.msra.mxu0 0.0
    %144 = vmatprep.subr.mxu0 0.0
    %145 = vmatpush2.msra.mxu0 0.0
    %146 = vmatprep.subr.mxu0 0.0
    %147 = vmatpush2.msra.mxu0 0.0
    %148 = vmatprep.subr.mxu0 0.0
    %149 = vmatpush2.msra.mxu0 0.0
    %150 = vmatprep.subr.mxu0 0.0
    %151 = vmatpush2.msra.mxu0 0.0
    %152 = vmatprep.subr.mxu0 0.0
    %153 = vmatpush2.msra.mxu0 0.0
    %154 = vmatprep.subr.mxu0 0.0
    %155 = vmatpush2.msra.mxu0 0.0
    %156 = vmatprep.subr.mxu0 0.0
    %157 = vmatpush2.msra.mxu0 0.0
    %158 = vmatprep.subr.mxu0 0.0
    %159 = vmatpush2.msra.mxu0 0.0
    %160 = vmatprep.subr.mxu0 0.0
    %161 = vmatpush2.msra.mxu0 0.0
    %162 = vmatprep.subr.mxu0 0.0
    %163 = vmatpush2.msra.mxu0 0.0
    %164 = vmatprep.subr.mxu0 0.0
    %165 = vmatpush2.msra.mxu0 0.0
    %166 = vmatprep.subr.mxu0 0.0
    %167 = vmatpush2.msra.mxu0 0.0
    %168 = vmatprep.mubr.f32.mxu0 0.0
    %169 = vmatmul.mubr.f32.gmra.mxu0 %v80
    %v170 = vpop.f32.mrf.mxu0
    %v171 = vadd.f32 %v102, %v170
    %v172 = vpop.f32.mrf.mxu0
    %173 = vdwg.mxu0
    %v174 = vtanh.pop %v171
    loop: start=0, step=1, limit=2
    $region46: #{tpu_custom_call.1} parent=1 // loop_pre_header
      _
    $region47: #{tpu_custom_call.1} parent=1 // loop_header
      %s176 = sphi 0, %s180
      %p177 = scmp.ge.s32.totalorder %s176, 2
      %v181 = vphi %v174, %v278
    $region48: #{tpu_custom_call.1} parent=1 // loop_header_branch
      %179 = sbr.rel (%p177) target = $region52
    $region49: #{tpu_custom_call.1} parent=1 // loop_body
      %s182 = smul.u32 %s176, 128
      %s183 = scalar_lea.vmem [#allocation7], %s182
      %v184 = vld [vmem:[%s183] sm:$0xff]
      %v185 = vld [vmem:[%s183 + $0x8] sm:$0xff]
      %v186 = vld [vmem:[%s183 + $0x10] sm:$0xff]
      %v187 = vld [vmem:[%s183 + $0x18] sm:$0xff]
      %v188 = vld [vmem:[%s183 + $0x20] sm:$0xff]
      %v189 = vld [vmem:[%s183 + $0x28] sm:$0xff]
      %v190 = vld [vmem:[%s183 + $0x30] sm:$0xff]
      %v191 = vld [vmem:[%s183 + $0x38] sm:$0xff]
      %v192 = vld [vmem:[%s183 + $0x40] sm:$0xff]
      %v193 = vld [vmem:[%s183 + $0x48] sm:$0xff]
      %v194 = vld [vmem:[%s183 + $0x50] sm:$0xff]
      %v195 = vld [vmem:[%s183 + $0x58] sm:$0xff]
      %v196 = vld [vmem:[%s183 + $0x60] sm:$0xff]
      %v197 = vld [vmem:[%s183 + $0x68] sm:$0xff]
      %v198 = vld [vmem:[%s183 + $0x70] sm:$0xff]
      %v199 = vld [vmem:[%s183 + $0x78] sm:$0xff]
      %s200 = scalar_lea.vmem %s4, %s176
      %v201 = vld [vmem:[%s200] sm:$0x1]
      %v203 = vlaneseq
      %v204 = vshrl.u32 %v203, 7
      %v205 = vsub.s32 0, %v204
      %v206 = vrot.slane %v201, %v205
      %208 = vmatprep.subr.mxu0 0.0
      %209 = vmatpush1.msra.mxu0 %v199
      %210 = vmatprep.subr.mxu0 0.0
      %211 = vmatpush1.msra.mxu0 %v198
      %212 = vmatprep.subr.mxu0 0.0
      %213 = vmatpush1.msra.mxu0 %v197
      %214 = vmatprep.subr.mxu0 0.0
      %215 = vmatpush1.msra.mxu0 %v196
      %216 = vmatprep.subr.mxu0 0.0
      %217 = vmatpush1.msra.mxu0 %v195
      %218 = vmatprep.subr.mxu0 0.0
      %219 = vmatpush1.msra.mxu0 %v194
      %220 = vmatprep.subr.mxu0 0.0
      %221 = vmatpush1.msra.mxu0 %v193
      %222 = vmatprep.subr.mxu0 0.0
      %223 = vmatpush1.msra.mxu0 %v192
      %224 = vmatprep.subr.mxu0 0.0
      %225 = vmatpush1.msra.mxu0 %v191
      %226 = vmatprep.subr.mxu0 0.0
      %227 = vmatpush1.msra.mxu0 %v190
      %228 = vmatprep.subr.mxu0 0.0
      %229 = vmatpush1.msra.mxu0 %v189
      %230 = vmatprep.subr.mxu0 0.0
      %231 = vmatpush1.msra.mxu0 %v188
      %232 = vmatprep.subr.mxu0 0.0
      %233 = vmatpush1.msra.mxu0 %v187
      %234 = vmatprep.subr.mxu0 0.0
      %235 = vmatpush1.msra.mxu0 %v186
      %236 = vmatprep.subr.mxu0 0.0
      %237 = vmatpush1.msra.mxu0 %v185
      %238 = vmatprep.subr.mxu0 0.0
      %239 = vmatpush1.msra.mxu0 %v184
      %240 = vmatprep.subr.mxu0 0.0
      %241 = vmatpush2.msra.mxu0 0.0
      %242 = vmatprep.subr.mxu0 0.0
      %243 = vmatpush2.msra.mxu0 0.0
      %244 = vmatprep.subr.mxu0 0.0
      %245 = vmatpush2.msra.mxu0 0.0
      %246 = vmatprep.subr.mxu0 0.0
      %247 = vmatpush2.msra.mxu0 0.0
      %248 = vmatprep.subr.mxu0 0.0
      %249 = vmatpush2.msra.mxu0 0.0
      %250 = vmatprep.subr.mxu0 0.0
      %251 = vmatpush2.msra.mxu0 0.0
      %252 = vmatprep.subr.mxu0 0.0
      %253 = vmatpush2.msra.mxu0 0.0
      %254 = vmatprep.subr.mxu0 0.0
      %255 = vmatpush2.msra.mxu0 0.0
      %256 = vmatprep.subr.mxu0 0.0
      %257 = vmatpush2.msra.mxu0 0.0
      %258 = vmatprep.subr.mxu0 0.0
      %259 = vmatpush2.msra.mxu0 0.0
      %260 = vmatprep.subr.mxu0 0.0
      %261 = vmatpush2.msra.mxu0 0.0
      %262 = vmatprep.subr.mxu0 0.0
      %263 = vmatpush2.msra.mxu0 0.0
      %264 = vmatprep.subr.mxu0 0.0
      %265 = vmatpush2.msra.mxu0 0.0
      %266 = vmatprep.subr.mxu0 0.0
      %267 = vmatpush2.msra.mxu0 0.0
      %268 = vmatprep.subr.mxu0 0.0
      %269 = vmatpush2.msra.mxu0 0.0
      %270 = vmatprep.subr.mxu0 0.0
      %271 = vmatpush2.msra.mxu0 0.0
      %272 = vmatprep.mubr.f32.mxu0 0.0
      %273 = vmatmul.mubr.f32.gmra.mxu0 %v181
      %v274 = vpop.f32.mrf.mxu0
      %v275 = vadd.f32 %v206, %v274
      %v276 = vpop.f32.mrf.mxu0
      %277 = vdwg.mxu0
      %v278 = vtanh.pop %v275
    $region50: #{tpu_custom_call.1} parent=1 // loop_footer
      %s180 = sadd.s32 1, %s176
    $region51: #{tpu_custom_call.1} parent=1 // loop_footer_branch
      %175 = sbr.rel target = $region47
    $region52: #{tpu_custom_call.1} parent=1 // loop_exit
      _
    %v279 = vld [vmem:[#allocation8] sm:$0xff]
    %v280 = vld [vmem:[#allocation8 + $0x8] sm:$0xff]
    %v281 = vld [vmem:[#allocation8 + $0x10] sm:$0xff]
    %v282 = vld [vmem:[#allocation8 + $0x18] sm:$0xff]
    %v283 = vld [vmem:[#allocation8 + $0x20] sm:$0xff]
    %v284 = vld [vmem:[#allocation8 + $0x28] sm:$0xff]
    %v285 = vld [vmem:[#allocation8 + $0x30] sm:$0xff]
    %v286 = vld [vmem:[#allocation8 + $0x38] sm:$0xff]
    %v287 = vld [vmem:[#allocation8 + $0x40] sm:$0xff]
    %v288 = vld [vmem:[#allocation8 + $0x48] sm:$0xff]
    %v289 = vld [vmem:[#allocation8 + $0x50] sm:$0xff]
    %v290 = vld [vmem:[#allocation8 + $0x58] sm:$0xff]
    %v291 = vld [vmem:[#allocation8 + $0x60] sm:$0xff]
    %v292 = vld [vmem:[#allocation8 + $0x68] sm:$0xff]
    %v293 = vld [vmem:[#allocation8 + $0x70] sm:$0xff]
    %v294 = vld [vmem:[#allocation8 + $0x78] sm:$0xff]
    %v295 = vld [vmem:[%s6] sm:$0x1]
    %v297 = vlaneseq
    %v298 = vshrl.u32 %v297, 7
    %v299 = vsub.s32 0, %v298
    %v300 = vrot.slane %v295, %v299
    %302 = vmatprep.subr.mxu0 0.0
    %303 = vmatpush1.msra.mxu0 %v294
    %304 = vmatprep.subr.mxu0 0.0
    %305 = vmatpush1.msra.mxu0 %v293
    %306 = vmatprep.subr.mxu0 0.0
    %307 = vmatpush1.msra.mxu0 %v292
    %308 = vmatprep.subr.mxu0 0.0
    %309 = vmatpush1.msra.mxu0 %v291
    %310 = vmatprep.subr.mxu0 0.0
    %311 = vmatpush1.msra.mxu0 %v290
    %312 = vmatprep.subr.mxu0 0.0
    %313 = vmatpush1.msra.mxu0 %v289
    %314 = vmatprep.subr.mxu0 0.0
    %315 = vmatpush1.msra.mxu0 %v288
    %316 = vmatprep.subr.mxu0 0.0
    %317 = vmatpush1.msra.mxu0 %v287
    %318 = vmatprep.subr.mxu0 0.0
    %319 = vmatpush1.msra.mxu0 %v286
    %320 = vmatprep.subr.mxu0 0.0
    %321 = vmatpush1.msra.mxu0 %v285
    %322 = vmatprep.subr.mxu0 0.0
    %323 = vmatpush1.msra.mxu0 %v284
    %324 = vmatprep.subr.mxu0 0.0
    %325 = vmatpush1.msra.mxu0 %v283
    %326 = vmatprep.subr.mxu0 0.0
    %327 = vmatpush1.msra.mxu0 %v282
    %328 = vmatprep.subr.mxu0 0.0
    %329 = vmatpush1.msra.mxu0 %v281
    %330 = vmatprep.subr.mxu0 0.0
    %331 = vmatpush1.msra.mxu0 %v280
    %332 = vmatprep.subr.mxu0 0.0
    %333 = vmatpush1.msra.mxu0 %v279
    %334 = vmatprep.subr.mxu0 0.0
    %335 = vmatpush2.msra.mxu0 0.0
    %336 = vmatprep.subr.mxu0 0.0
    %337 = vmatpush2.msra.mxu0 0.0
    %338 = vmatprep.subr.mxu0 0.0
    %339 = vmatpush2.msra.mxu0 0.0
    %340 = vmatprep.subr.mxu0 0.0
    %341 = vmatpush2.msra.mxu0 0.0
    %342 = vmatprep.subr.mxu0 0.0
    %343 = vmatpush2.msra.mxu0 0.0
    %344 = vmatprep.subr.mxu0 0.0
    %345 = vmatpush2.msra.mxu0 0.0
    %346 = vmatprep.subr.mxu0 0.0
    %347 = vmatpush2.msra.mxu0 0.0
    %348 = vmatprep.subr.mxu0 0.0
    %349 = vmatpush2.msra.mxu0 0.0
    %350 = vmatprep.subr.mxu0 0.0
    %351 = vmatpush2.msra.mxu0 0.0
    %352 = vmatprep.subr.mxu0 0.0
    %353 = vmatpush2.msra.mxu0 0.0
    %354 = vmatprep.subr.mxu0 0.0
    %355 = vmatpush2.msra.mxu0 0.0
    %356 = vmatprep.subr.mxu0 0.0
    %357 = vmatpush2.msra.mxu0 0.0
    %358 = vmatprep.subr.mxu0 0.0
    %359 = vmatpush2.msra.mxu0 0.0
    %360 = vmatprep.subr.mxu0 0.0
    %361 = vmatpush2.msra.mxu0 0.0
    %362 = vmatprep.subr.mxu0 0.0
    %363 = vmatpush2.msra.mxu0 0.0
    %364 = vmatprep.subr.mxu0 0.0
    %365 = vmatpush2.msra.mxu0 0.0
    %366 = vmatprep.mubr.f32.mxu0 0.0
    %367 = vmatmul.mubr.f32.gmra.mxu0 %v181
    %v368 = vpop.f32.mrf.mxu0
    %v369 = vadd.f32 %v300, %v368
    %v370 = vpop.f32.mrf.mxu0
    %371 = vdwg.mxu0
    %372 = vst [vmem:[#allocation10] sm:$0xff] %v369
    // Predicated region
    $region53: #{tpu_custom_call.1} parent=1 // pred_check
      _
    $region54: #{tpu_custom_call.1} parent=1 // pred_check_branch
      %374 = sbr.rel (0) target = $region56
    $region55: #{tpu_custom_call.1} parent=1 // pred_region
      %s376 = ssub.s32 128, 128
      %377 = vsyncadd [#allocation4], %s376
      %s379 = sshll.u32 [#allocation10], 4
      %s380 = int_to_ptr.vmem [resolvable:$true] %s379
      %382 = dma.vmem_to_hbm [thread:$0]  %s380, 128, %s7, [#allocation4]
    $region56: #{tpu_custom_call.1} parent=1 // pred_fallthru
      _
    // Predicated region
    $region57: #{tpu_custom_call.1} parent=1 // pred_check
      _
    $region58: #{tpu_custom_call.1} parent=1 // pred_check_branch
      %384 = sbr.rel (0) target = $region60
    $region59: #{tpu_custom_call.1} parent=1 // pred_region
      %385 = dma.done [#allocation4], 128
    $region60: #{tpu_custom_call.1} parent=1 // pred_fallthru
      _
    %386 = vsyncpa [#allocation3], 1
    %387 = vsyncpa [#allocation6], 1
    %388 = vsyncpa [#allocation9], 1
    %389 = vsyncpa [#allocation4], 1

</llo_original>
